<compile_context>
chip_gen: v5e
topology: v5e:2x2
jax: 0.10.0
libtpu: 0.0.40
codegen_flags: <defaults>
</compile_context>

<pallas_src>
import jax
import jax.numpy as jnp
from jax.experimental import pallas as pl
from jax.experimental.pallas import tpu as pltpu


def _round_up(x: int, m: int) -> int:
    return ((x + m - 1) // m) * m


def decoder_kernel(x_ref, w_ref, b_ref, o_ref):
    # x_ref: (TBf, Lf)  w_ref: (Lf, Df)  b_ref: (1, Df)  o_ref: (TBf, Df)
    y = jnp.dot(x_ref[...], w_ref[...], preferred_element_type=jnp.float32)
    y = y + b_ref[...]
    o_ref[...] = jnp.tanh(y).astype(o_ref.dtype)


def decoder_forward(x, weight, bias, *, block_b: int = 1024,
                    out_dtype=None, min_pallas_rows: int = 64):
    """x: [B, latent], weight: [latent, out], bias: [out] -> [B, out]."""
    B, L = x.shape
    L2, D = weight.shape
    assert L == L2, (L, L2)
    out_dtype = out_dtype or x.dtype

    # Tiny batches: fixed pallas_call overhead dwarfs the real work; a fused
    # XLA matmul+tanh is strictly faster there.
    if B < min_pallas_rows:
        return jnp.tanh(x @ weight + bias).astype(out_dtype)

    # ---- Lane-folding layout -------------------------------------------
    # If D divides 128, pack `fold` logical output rows into one 128-lane row
    # via a block-diagonal weight; reshapes on x / out are free (row-major).
    if D <= 128 and 128 % D == 0:
        fold, Dp = 128 // D, D
    else:
        fold, Dp = 1, _round_up(D, 128)   # fallback: zero-pad lane dim

    w_p = weight if Dp == D else jnp.pad(weight, ((0, 0), (0, Dp - D)))
    b_p = bias if Dp == D else jnp.pad(bias, (0, Dp - D))

    if fold > 1:
        w_k = jnp.kron(jnp.eye(fold, dtype=w_p.dtype), w_p)   # (fold*L, fold*Dp)
        b_k = jnp.tile(b_p, fold)[None, :]                    # (1, fold*Dp)
    else:
        w_k = w_p
        b_k = b_p[None, :]

    # Pad at most fold-1 rows so the fold reshape is exact, then fold.
    B_rows = _round_up(B, fold)
    x_p = x if B_rows == B else jnp.pad(x, ((0, B_rows - B), (0, 0)))
    Bf = B_rows // fold
    Lf = fold * L
    Df = fold * Dp
    x_f = x_p.reshape(Bf, Lf)             # free row-major reshape

    # ---- Batch tile sizing ----------------------------------------------
    # Folded rows per tile; aim for an even number of near-equal grid steps
    # (feeds both v7x TensorCores) with ragged last block handled by Pallas.
    max_tbf = max(8, _round_up(block_b, 8 * fold) // fold)
    if Bf < 16:
        tbf = Bf                           # single block == full dim (legal)
    else:
        n_steps = max(2, pl.cdiv(Bf, max_tbf))
        n_steps += n_steps % 2             # even step count for megacore
        tbf = _round_up(pl.cdiv(Bf, n_steps), 8)
    grid = (pl.cdiv(Bf, tbf),)

    in_itemsize = jnp.dtype(x.dtype).itemsize
    out_itemsize = jnp.dtype(out_dtype).itemsize
    cost = pl.CostEstimate(
        flops=2 * Bf * Lf * Df,
        transcendentals=Bf * Df,           # tanh
        bytes_accessed=(x_f.size * in_itemsize
                        + w_k.size * jnp.dtype(w_k.dtype).itemsize
                        + b_k.size * jnp.dtype(b_k.dtype).itemsize
                        + Bf * Df * out_itemsize),
    )

    out_f = pl.pallas_call(
        decoder_kernel,
        out_shape=jax.ShapeDtypeStruct((Bf, Df), out_dtype),
        grid_spec=pltpu.PrefetchScalarGridSpec(
            num_scalar_prefetch=0,
            grid=grid,
            in_specs=[
                # x: new folded batch tile each step (pipelined).
                pl.BlockSpec((tbf, Lf), lambda i: (i, 0)),
                # weight / bias: same block every step -> VMEM-resident.
                pl.BlockSpec((Lf, Df), lambda i: (0, 0)),
                pl.BlockSpec((1, Df), lambda i: (0, 0)),
            ],
            out_specs=pl.BlockSpec((tbf, Df), lambda i: (i, 0)),
        ),
        compiler_params=pltpu.CompilerParams(
            dimension_semantics=("parallel",)),
        cost_estimate=cost,
    )(x_f, w_k, b_k)

    out = out_f.reshape(Bf * fold, Dp)     # free reshape back to logical rows
    if Bf * fold != B or Dp != D:
        out = out[:B, :D]
    return out


if __name__ == "__main__":
    latent_size = 10
    output_dim = 32

    key = jax.random.PRNGKey(0)
    kx, kw, kb = jax.random.split(key, 3)

    # Deterministic init mimicking nn.Linear's uniform(-1/sqrt(in), 1/sqrt(in)).
    bound = 1.0 / (latent_size ** 0.5)
    weight = jax.random.uniform(
        kw, (latent_size, output_dim), minval=-bound, maxval=bound,
        dtype=jnp.float32)
    bias = jax.random.uniform(
        kb, (output_dim,), minval=-bound, maxval=bound, dtype=jnp.float32)

    def ref_fn(xv):
        return jnp.tanh(xv @ weight + bias)

    # (1) Main Pallas path: fold=4, 2-step parallel grid.
    x1 = jax.random.normal(kx, (256, latent_size), dtype=jnp.float32)
    out1 = jax.block_until_ready(decoder_forward(x1, weight, bias))
    assert out1.shape == (256, output_dim)
    assert jnp.allclose(out1, ref_fn(x1), atol=1e-5, rtol=1e-5)

    # (2) Ragged fold path (B not a multiple of 4), forced through the kernel.
    x2 = jax.random.normal(kx, (53, latent_size), dtype=jnp.float32)
    out2 = jax.block_until_ready(
        decoder_forward(x2, weight, bias, min_pallas_rows=0))
    assert out2.shape == (53, output_dim)
    assert jnp.allclose(out2, ref_fn(x2), atol=1e-5, rtol=1e-5)

    # (3) Tiny-batch fallback (plain fused XLA matmul+tanh).
    x3 = jax.random.normal(kx, (8, latent_size), dtype=jnp.float32)
    out3 = jax.block_until_ready(decoder_forward(x3, weight, bias))
    assert out3.shape == (8, output_dim)
    assert jnp.allclose(out3, ref_fn(x3), atol=1e-5, rtol=1e-5)

    print("KERNEL_OK")
</pallas_src>

<mosaic_0001>
module attributes {stable_mosaic.version = 11 : i64} {
  func.func @decoder_kernel(%arg0: i32, %arg1: memref<32x40xf32, #tpu.memory_space<vmem>>, %arg2: memref<40x128xf32, #tpu.memory_space<vmem>>, %arg3: memref<1x128xf32, #tpu.memory_space<vmem>>, %arg4: memref<32x128xf32, #tpu.memory_space<vmem>>) attributes {dimension_semantics = [#tpu.dimension_semantics<parallel>], iteration_bounds = array<i64: 2>, scalar_prefetch = 0 : i64, scratch_operands = 0 : i64, tpu.core_type = #tpu.core_type<tc>, window_params = [{transform_indices = @transform_0, window_bounds = array<i64: 32, 40>}, {pipeline_mode = #tpu.pipeline_mode<synchronous>, transform_indices = @transform_1, window_bounds = array<i64: 40, 128>}, {pipeline_mode = #tpu.pipeline_mode<synchronous>, transform_indices = @transform_2, window_bounds = array<i64: 1, 128>}, {transform_indices = @transform_3, window_bounds = array<i64: 32, 128>}]} {
    %c0 = arith.constant 0 : index
    %c0_0 = arith.constant 0 : index
    %0 = vector.load %arg1[%c0, %c0_0] : memref<32x40xf32, #tpu.memory_space<vmem>>, vector<32x40xf32>
    %c0_1 = arith.constant 0 : index
    %c0_2 = arith.constant 0 : index
    %1 = vector.load %arg2[%c0_1, %c0_2] : memref<40x128xf32, #tpu.memory_space<vmem>>, vector<40x128xf32>
    %cst = arith.constant dense<0.000000e+00> : vector<32x128xf32>
    %2 = tpu.matmul %0, %1, %cst {dimension_numbers = #tpu.dot_dimension_numbers<[1], [0], [0], [1], [0, 0, 1, 1], [], []>} : vector<32x40xf32>, vector<40x128xf32>, vector<32x128xf32> -> vector<32x128xf32>
    %c0_3 = arith.constant 0 : index
    %c0_4 = arith.constant 0 : index
    %3 = vector.load %arg3[%c0_3, %c0_4] : memref<1x128xf32, #tpu.memory_space<vmem>>, vector<1x128xf32>
    %4 = vector.broadcast %3 : vector<1x128xf32> to vector<32x128xf32>
    %5 = arith.addf %2, %4 : vector<32x128xf32>
    %6 = math.tanh %5 : vector<32x128xf32>
    %c0_5 = arith.constant 0 : index
    %c0_6 = arith.constant 0 : index
    %7 = vector.load %arg4[%c0_5, %c0_6] : memref<32x128xf32, #tpu.memory_space<vmem>>, vector<32x128xf32>
    tpu.vector_store %arg4[%c0_5, %c0_6], %6 {strides = array<i32>} : memref<32x128xf32, #tpu.memory_space<vmem>>, vector<32x128xf32>,
    return
  }
  func.func @transform_0(%arg0: i32) -> (i32, i32) {
    %c0_i32 = arith.constant 0 : i32
    %c0_i32_0 = arith.constant 0 : i32
    return %arg0, %c0_i32 : i32, i32
  }
  func.func @transform_1(%arg0: i32) -> (i32, i32) {
    %c0_i32 = arith.constant 0 : i32
    %c0_i32_0 = arith.constant 0 : i32
    %c0_i32_1 = arith.constant 0 : i32
    return %c0_i32, %c0_i32_0 : i32, i32
  }
  func.func @transform_2(%arg0: i32) -> (i32, i32) {
    %c0_i32 = arith.constant 0 : i32
    %c0_i32_0 = arith.constant 0 : i32
    %c0_i32_1 = arith.constant 0 : i32
    return %c0_i32, %c0_i32_0 : i32, i32
  }
  func.func @transform_3(%arg0: i32) -> (i32, i32) {
    %c0_i32 = arith.constant 0 : i32
    %c0_i32_0 = arith.constant 0 : i32
    return %arg0, %c0_i32 : i32, i32
  }
}

</mosaic_0001>

<llo_original>
// kernel: tpu_custom_call.1
$region0: #{tpu_custom_call.1}
  #allocation0 [shape = 'u32[]', space=smem, size = 0x4, offset = 0x4, fixed_abs, tag = 'smem constant byte address 0x4 - core index']
  #allocation1 [shape = 'u32[72,128]{1,0:T(1,128)}', space=vmem, size = 0x9000, scoped, tag = 'internal scratch']
  %s0 = inlined_call_operand.vmem [shape: f32[64,40], index: 0, kind: input, shape index: {}]
  %s1 = inlined_call_operand.vmem [shape: f32[40,128], index: 1, kind: input, shape index: {}]
  %s2 = inlined_call_operand.vmem [shape: f32[1,128], index: 2, kind: input, shape index: {}]
  %s3 = inlined_call_operand.hbm [shape: f32[64,128], index: 3, kind: output, shape index: {}]
  %s4 = sld [smem:[#allocation0]]
  $region45: #{tpu_custom_call.1} parent=0
    _
  %s6 = ssub.s32 1, %s4
  %s7 = scalar_select 0, %s6, %s4
  $region1: #{tpu_custom_call.1} parent=0
    #allocation2 [shape = 'u8[32768]{0}', space=vmem, size = 0x8000, scoped, tag = 'output window, operand 0']
    #allocation3 [shape = 's32[2]{0}', space=sflag, size = 0x8, scoped, tag = 'scoped memory for tpu_custom_call.1']
    %8 = vsyncpa [#allocation3], 0
    %s9 = scalar_lea.sflag [#allocation3], 1
    %10 = vsyncpa %s9, 0
    loop: start=0, step=1, limit=4
    $region2: #{tpu_custom_call.1} parent=1 // loop_pre_header
      _
    $region3: #{tpu_custom_call.1} parent=1 // loop_header
      %s12 = sphi 0, %s16
      %p13 = scmp.ge.s32.totalorder %s12, 4
      %s22 = sphi 0, %s24
      %s25 = sphi 0, %s22
      %s26 = sphi 0, %s25
      %s42 = sphi 0, %s26
      %s46 = sphi 0, %s46
      %s48 = sphi 0, %s46
      %s49 = sphi 0, %s48
      %s63 = sphi 0, %s49
      %s67 = sphi 0, %s67
      %s69 = sphi 0, %s67
      %s70 = sphi 0, %s69
      %s84 = sphi 0, %s70
      %s90 = sphi 0, %s92
      %s93 = sphi 0, %s90
      %s94 = sphi 0, %s93
      %s110 = sphi 0, %s94
    $region4: #{tpu_custom_call.1} parent=1 // loop_header_branch
      %15 = sbr.rel (%p13) target = $region8
    $region5: #{tpu_custom_call.1} parent=1 // loop_body
      %s17 = ssub.s32 %s12, 1
      %s18 = ssub.s32 %s12, 2
      %s19 = sadd.s32 %s12, 1
      %s20 = ssub.s32 %s12, %s19
      %p21 = scmp.eq.s32.totalorder %s20, 0
      %s23 = sadd.s32 %s22, 1
      %s24 = scalar_select %p21, %s22, %s23
      %p27 = pneg %p21
      %p28 = scmp.eq.s32.totalorder %s12, 1
      %p29 = por %p27, %p28
      %p30 = scmp.ne.s32.totalorder %s22, %s25
      %p31 = scmp.eq.s32.totalorder %s12, 0
      %p32 = por %p30, %p31
      %p33 = scmp.ne.s32.totalorder %s22, %s25
      %p34 = scmp.eq.s32.totalorder %s17, 1
      %p35 = por %p33, %p34
      %p36 = scmp.ne.s32.totalorder %s25, %s26
      %p37 = scmp.eq.s32.totalorder %s17, 0
      %p38 = por %p36, %p37
      %p39 = scmp.ne.s32.totalorder %s25, %s26
      %p40 = scmp.eq.s32.totalorder %s18, 1
      %p41 = por %p39, %p40
      %p43 = scmp.ne.s32.totalorder %s26, %s42
      %p44 = scmp.eq.s32.totalorder %s18, 0
      %p45 = por %p43, %p44
      %s47 = sadd.s32 %s46, 1
      %p50 = scmp.eq.s32.totalorder %s12, 1
      %p51 = scmp.ne.s32.totalorder %s46, %s48
      %p52 = scmp.eq.s32.totalorder %s12, 0
      %p53 = por %p51, %p52
      %p54 = scmp.ne.s32.totalorder %s46, %s48
      %p55 = scmp.eq.s32.totalorder %s17, 1
      %p56 = por %p54, %p55
      %p57 = scmp.ne.s32.totalorder %s48, %s49
      %p58 = scmp.eq.s32.totalorder %s17, 0
      %p59 = por %p57, %p58
      %p60 = scmp.ne.s32.totalorder %s48, %s49
      %p61 = scmp.eq.s32.totalorder %s18, 1
      %p62 = por %p60, %p61
      %p64 = scmp.ne.s32.totalorder %s49, %s63
      %p65 = scmp.eq.s32.totalorder %s18, 0
      %p66 = por %p64, %p65
      %s68 = sadd.s32 %s67, 1
      %p71 = scmp.eq.s32.totalorder %s12, 1
      %p72 = scmp.ne.s32.totalorder %s67, %s69
      %p73 = scmp.eq.s32.totalorder %s12, 0
      %p74 = por %p72, %p73
      %p75 = scmp.ne.s32.totalorder %s67, %s69
      %p76 = scmp.eq.s32.totalorder %s17, 1
      %p77 = por %p75, %p76
      %p78 = scmp.ne.s32.totalorder %s69, %s70
      %p79 = scmp.eq.s32.totalorder %s17, 0
      %p80 = por %p78, %p79
      %p81 = scmp.ne.s32.totalorder %s69, %s70
      %p82 = scmp.eq.s32.totalorder %s18, 1
      %p83 = por %p81, %p82
      %p85 = scmp.ne.s32.totalorder %s70, %s84
      %p86 = scmp.eq.s32.totalorder %s18, 0
      %p87 = por %p85, %p86
      %s88 = ssub.s32 %s12, %s19
      %p89 = scmp.eq.s32.totalorder %s88, 0
      %s91 = sadd.s32 %s90, 1
      %s92 = scalar_select %p89, %s90, %s91
      %p95 = pneg %p89
      %p96 = scmp.eq.s32.totalorder %s12, 1
      %p97 = por %p95, %p96
      %p98 = scmp.ne.s32.totalorder %s90, %s93
      %p99 = scmp.eq.s32.totalorder %s12, 0
      %p100 = por %p98, %p99
      %p101 = scmp.ne.s32.totalorder %s90, %s93
      %p102 = scmp.eq.s32.totalorder %s17, 1
      %p103 = por %p101, %p102
      %p104 = scmp.ne.s32.totalorder %s93, %s94
      %p105 = scmp.eq.s32.totalorder %s17, 0
      %p106 = por %p104, %p105
      %p107 = scmp.ne.s32.totalorder %s93, %s94
      %p108 = scmp.eq.s32.totalorder %s18, 1
      %p109 = por %p107, %p108
      %p111 = scmp.ne.s32.totalorder %s94, %s110
      %p112 = scmp.eq.s32.totalorder %s18, 0
      %p113 = por %p111, %p112
      %p114 = scmp.le.s32.totalorder 1, %s12
      %p115 = scmp.lt.s32.totalorder %s12, 3
      %p116 = pnand %p114, %p115
      %p117 = pneg %p116
      // Predicated region
      $region9: #{tpu_custom_call.1} parent=5 // pred_check
        _
      $region10: #{tpu_custom_call.1} parent=5 // pred_check_branch
        %119 = sbr.rel (%p116) target = $region12
      $region11: #{tpu_custom_call.1} parent=5 // pred_region
        %s120 = ssub.s32 %s12, 1
        // Predicated region
        $region13: #{tpu_custom_call.1} parent=11 // pred_check
          %p121 = pneg %p59
        $region14: #{tpu_custom_call.1} parent=11 // pred_check_branch
          %123 = sbr.rel (%p121) target = $region16
        $region15: #{tpu_custom_call.1} parent=11 // pred_region
          _
        $region16: #{tpu_custom_call.1} parent=11 // pred_fallthru
          _
        // Predicated region
        $region17: #{tpu_custom_call.1} parent=11 // pred_check
          %p124 = pneg %p80
        $region18: #{tpu_custom_call.1} parent=11 // pred_check_branch
          %126 = sbr.rel (%p124) target = $region20
        $region19: #{tpu_custom_call.1} parent=11 // pred_region
          _
        $region20: #{tpu_custom_call.1} parent=11 // pred_fallthru
          _
      $region12: #{tpu_custom_call.1} parent=5 // pred_fallthru
        _
      %p127 = scmp.lt.s32.totalorder %s12, 2
      // Predicated region
      $region21: #{tpu_custom_call.1} parent=5 // pred_check
        %p128 = pneg %p127
      $region22: #{tpu_custom_call.1} parent=5 // pred_check_branch
        %130 = sbr.rel (%p128) target = $region24
      $region23: #{tpu_custom_call.1} parent=5 // pred_region
        // Predicated region
        $region25: #{tpu_custom_call.1} parent=23 // pred_check
          %p131 = pneg %p32
        $region26: #{tpu_custom_call.1} parent=23 // pred_check_branch
          %133 = sbr.rel (%p131) target = $region28
        $region27: #{tpu_custom_call.1} parent=23 // pred_region
          %s134 = smul.u32 4, %s12
          %p135 = scmp.lt.s32.totalorder %s134, 7
          %s136 = scalar_select %p135, %s134, 7
          %s137 = smul.addr %s136, 8
          %s138 = scalar_lea.vmem %s0, %s137
          %s139 = smul.u32 4, %s12
        $region28: #{tpu_custom_call.1} parent=23 // pred_fallthru
          _
      $region24: #{tpu_custom_call.1} parent=5 // pred_fallthru
        _
      %p140 = scmp.le.s32.totalorder 1, %s12
      %p141 = scmp.lt.s32.totalorder %s12, 3
      %p142 = pnand %p140, %p141
      %p143 = pneg %p142
      // Predicated region
      $region29: #{tpu_custom_call.1} parent=5 // pred_check
        _
      $region30: #{tpu_custom_call.1} parent=5 // pred_check_branch
        %145 = sbr.rel (%p142) target = $region32
      $region31: #{tpu_custom_call.1} parent=5 // pred_region
        %s146 = ssub.s32 %s12, 1
        %s147 = smul.u32 4, %s17
        %p148 = scmp.lt.s32.totalorder %s147, 7
        %s149 = scalar_select %p148, %s147, 7
        %s150 = smul.addr %s149, 8
        %s151 = scalar_lea.vmem %s0, %s150
        %p152 = pneg %p38
        %p153 = pneg %p35
        %p154 = pneg %p59
        %p155 = pneg %p56
        %p156 = pneg %p80
        %p157 = pneg %p77
        %p158 = pneg %p106
        %p159 = pneg %p103
        %s160 = sand.u32 %s93, 1
        %s161 = scalar_lea.sflag [#allocation3], %s160
        %s162 = sand.u32 %s93, 1
        %s163 = smul.addr %s162, 32
        %s164 = scalar_lea.vmem [#allocation2], %s163
        %s165 = smul.u32 4, %s17
        %p166 = scmp.lt.s32.totalorder %s165, 7
        %s167 = scalar_select %p166, %s165, 7
        %s168 = smul.addr %s167, 8
        %s169 = scalar_lea.vmem %s0, %s168
        %s170 = smul.u32 4, %s17
        %s171 = smul.u32 4, %s17
        %v172 = vld [vmem:[%s169] sm:$0xff]
        %v173 = vld [vmem:[%s169 + $0x8] sm:$0xff]
        %v174 = vld [vmem:[%s169 + $0x10] sm:$0xff]
        %v175 = vld [vmem:[%s169 + $0x18] sm:$0xff]
        %v176 = vld [vmem:[%s1] sm:$0xff]
        %v177 = vld [vmem:[%s1 + $0x8] sm:$0xff]
        %v178 = vld [vmem:[%s1 + $0x10] sm:$0xff]
        %v179 = vld [vmem:[%s1 + $0x18] sm:$0xff]
        %v180 = vld [vmem:[%s1 + $0x20] sm:$0xff]
        %v181 = vld [vmem:[%s2] sm:$0x1]
        %v183 = vperm.slane %v181, 0
        %vm185 = vcmask 326656
        %v187 = vsel %vm185, %v172, 0
        %v190 = vsel %vm185, %v173, 0
        %v193 = vsel %vm185, %v174, 0
        %v196 = vsel %vm185, %v175, 0
        %198 = vmatpush.msra.mxu0 0.0
        %199 = vmatpush.msra.mxu0 0.0
        %200 = vmatpush.msra.mxu0 0.0
        %201 = vmatpush.msra.mxu0 0.0
        %202 = vmatpush.msra.mxu0 0.0
        %203 = vmatpush.msra.mxu0 0.0
        %204 = vmatpush.msra.mxu0 0.0
        %205 = vmatpush.msra.mxu0 0.0
        %206 = vmatpush.msra.mxu0 0.0
        %207 = vmatpush.msra.mxu0 0.0
        %208 = vmatpush.msra.mxu0 0.0
        %209 = vmatpush.msra.mxu0 %v180
        %210 = vmatpush.msra.mxu0 %v179
        %211 = vmatpush.msra.mxu0 %v178
        %212 = vmatpush.msra.mxu0 %v177
        %213 = vmatpush.msra.mxu0 %v176
        %214 = vmatmul.f32.gmra.mxu0 %v187
        %v215 = vpop.f32.mrf.mxu0
        %v216 = vadd.f32 %v183, %v215
        %217 = vmatmul.f32.gmra.mxu0 %v190
        %v218 = vpop.f32.mrf.mxu0
        %v219 = vadd.f32 %v183, %v218
        %220 = vmatmul.f32.gmra.mxu0 %v193
        %v221 = vpop.f32.mrf.mxu0
        %v222 = vadd.f32 %v183, %v221
        %223 = vmatmul.f32.gmra.mxu0 %v196
        %v224 = vpop.f32.mrf.mxu0
        %v225 = vadd.f32 %v183, %v224
        %226 = vdwg.mxu0
        %v227 = vtanh.pop %v216
        %v228 = vtanh.pop %v219
        %v229 = vtanh.pop %v222
        %v230 = vtanh.pop %v225
        %231 = vst [vmem:[%s164] sm:$0xff] %v227
        %232 = vst [vmem:[%s164 + $0x8] sm:$0xff] %v228
        %233 = vst [vmem:[%s164 + $0x10] sm:$0xff] %v229
        %234 = vst [vmem:[%s164 + $0x18] sm:$0xff] %v230
        %s235 = sand.u32 %s93, 1
        %s236 = scalar_lea.sflag [#allocation3], %s235
        %s237 = sand.u32 %s93, 1
        %s238 = smul.addr %s237, 32
        %s239 = scalar_lea.vmem [#allocation2], %s238
        // Predicated region
        $region33: #{tpu_custom_call.1} parent=31 // pred_check
          %p240 = pneg %p103
        $region34: #{tpu_custom_call.1} parent=31 // pred_check_branch
          %242 = sbr.rel (%p240) target = $region36
        $region35: #{tpu_custom_call.1} parent=31 // pred_region
          %s243 = smul.u32 4, %s17
          %245 = vsyncadd %s236, 0
          %s246 = smul.addr %s243, 8
          %s247 = scalar_lea.hbm %s3, %s246
          %s248 = sshll.u32 %s239, 4
          %s249 = int_to_ptr.vmem [resolvable:$true] %s248
          %s250 = sshll.u32 %s247, 4
          %s251 = int_to_ptr.hbm [resolvable:$true] %s250
          %256 = dma.vmem_to_hbm [thread:$0]  %s249, 512, %s251, %s236, 128, 128, 8
        $region36: #{tpu_custom_call.1} parent=31 // pred_fallthru
          _
      $region32: #{tpu_custom_call.1} parent=5 // pred_fallthru
        _
      %p257 = scmp.le.s32.totalorder 2, %s12
      // Predicated region
      $region37: #{tpu_custom_call.1} parent=5 // pred_check
        %p258 = pneg %p257
      $region38: #{tpu_custom_call.1} parent=5 // pred_check_branch
        %260 = sbr.rel (%p258) target = $region40
      $region39: #{tpu_custom_call.1} parent=5 // pred_region
        %s261 = ssub.s32 %s12, 2
        // Predicated region
        $region41: #{tpu_custom_call.1} parent=39 // pred_check
          %p262 = pneg %p109
        $region42: #{tpu_custom_call.1} parent=39 // pred_check_branch
          %264 = sbr.rel (%p262) target = $region44
        $region43: #{tpu_custom_call.1} parent=39 // pred_region
          %s265 = sand.u32 %s94, 1
          %s266 = scalar_lea.sflag [#allocation3], %s265
          %s267 = sand.u32 %s94, 1
          %s268 = smul.addr %s267, 32
          %s269 = scalar_lea.vmem [#allocation2], %s268
          %271 = dma.done %s266, 512
        $region44: #{tpu_custom_call.1} parent=39 // pred_fallthru
          _
      $region40: #{tpu_custom_call.1} parent=5 // pred_fallthru
        _
    $region6: #{tpu_custom_call.1} parent=1 // loop_footer
      %s16 = sadd.s32 1, %s12
    $region7: #{tpu_custom_call.1} parent=1 // loop_footer_branch
      %11 = sbr.rel target = $region3
    $region8: #{tpu_custom_call.1} parent=1 // loop_exit
      _
    %272 = vsyncpa [#allocation3], 1
    %s273 = scalar_lea.sflag [#allocation3], 1
    %274 = vsyncpa %s273, 1

</llo_original>
